<compile_context>
chip_gen: v7x
topology: tpu7x:2x2x1
jax: 0.10.0
libtpu: 0.0.40
codegen_flags: <defaults>
</compile_context>

<pallas_src>
import functools

import jax
import jax.numpy as jnp
from jax.experimental import pallas as pl
from jax.experimental.pallas import tpu as pltpu

EPS = 1e-5                              # PyTorch nn.LayerNorm default
VMEM_LIMIT_BYTES = 64 * 1024 * 1024     # fits v7x (64 MiB); v5e/v6e have 128 MiB


def _compiler_params(dim_sem):
    return pltpu.CompilerParams(dimension_semantics=dim_sem,
                                vmem_limit_bytes=VMEM_LIMIT_BYTES)


def _layernorm(x, gamma, beta):
    mu = jnp.mean(x, axis=-1, keepdims=True)
    var = jnp.mean((x - mu) ** 2, axis=-1, keepdims=True)
    return (x - mu) * jax.lax.rsqrt(var + EPS) * gamma + beta


def _fold_ln_linear(gamma, beta, w, bias, extra_scale=1.0):
    """Fold a LayerNorm affine (and an optional scalar) into a Linear.

    LayerNorm(x) @ w + bias == x_hat @ (gamma[:,None]*w) + (beta @ w + bias),
    so the kernels only need the un-affined x_hat (shared by k and v).
    The bias fold avoids a matmul (keeps full f32 precision in the wrapper).
    """
    w_f = (gamma.reshape(-1, 1) * w) * extra_scale
    b_f = ((beta.reshape(-1, 1) * w).sum(axis=0, keepdims=True)
           + bias.reshape(1, -1)) * extra_scale
    return w_f, b_f


# ----------------------------------------------------------------------------
# Kernel 1: k / v projections of the x tokens (native NCHW layout) + h-token v
# ----------------------------------------------------------------------------
def proj_kv_kernel(x_ref, h_ref, wk_t_ref, bk_ref, wv_t_ref, bvc_ref, bvr_ref,
                   kxt_ref, vxt_ref, vh_ref, *, mm_dtype):
    # --- x tokens, kept in their native (D, hw) layout: LN over D = axis 0,
    #     transposed matmul outputs so no data transpose is ever materialized.
    xb = x_ref[...].astype(jnp.float32)                       # (D, hw)
    mu = jnp.mean(xb, axis=0, keepdims=True)
    var = jnp.mean((xb - mu) ** 2, axis=0, keepdims=True)
    x_hat = ((xb - mu) * jax.lax.rsqrt(var + EPS)).astype(mm_dtype)

    kxt = jnp.dot(wk_t_ref[...], x_hat,
                  preferred_element_type=jnp.float32)          # (inner, hw)
    kxt_ref[...] = (kxt + bk_ref[...].astype(jnp.float32)).astype(kxt_ref.dtype)

    vxt = jnp.dot(wv_t_ref[...], x_hat,
                  preferred_element_type=jnp.float32)          # (dh, hw)
    vxt_ref[...] = vxt + bvc_ref[...].astype(jnp.float32)

    # --- h tokens (only the v projection is needed here; q / k_h are produced
    #     inside the fused attention kernel where h is loaded anyway).
    hb = h_ref[...].astype(jnp.float32)                        # (l, D)
    mu_h = jnp.mean(hb, axis=-1, keepdims=True)
    var_h = jnp.mean((hb - mu_h) ** 2, axis=-1, keepdims=True)
    h_hat = ((hb - mu_h) * jax.lax.rsqrt(var_h + EPS)).astype(mm_dtype)
    vh = jax.lax.dot_general(h_hat, wv_t_ref[...], (((1,), (1,)), ((), ())),
                             preferred_element_type=jnp.float32)  # (l, dh)
    vh_ref[...] = vh + bvr_ref[...].astype(jnp.float32)


def project_kv(x3, h_b, wk_t, bk_col, wv_t, bv_col, bv_row, *, mm_dtype, act_dtype):
    b, D, hw = x3.shape
    l = h_b.shape[1]
    inner = wk_t.shape[0]
    dh = wv_t.shape[0]
    kernel = functools.partial(proj_kv_kernel, mm_dtype=mm_dtype)
    return pl.pallas_call(
        kernel,
        out_shape=(
            jax.ShapeDtypeStruct((b, inner, hw), act_dtype),   # k_x^T (lane-dense)
            jax.ShapeDtypeStruct((b, dh, hw), jnp.float32),    # v_x^T partials
            jax.ShapeDtypeStruct((b, l, dh), jnp.float32),     # v_h partials
        ),
        grid=(b,),
        in_specs=[
            pl.BlockSpec((None, D, hw), lambda i: (i, 0, 0)),
            pl.BlockSpec((None, l, D), lambda i: (i, 0, 0)),
            # resident (constant-index) weights / biases
            pl.BlockSpec((inner, D), lambda i: (0, 0)),
            pl.BlockSpec((inner, 1), lambda i: (0, 0)),
            pl.BlockSpec((dh, D), lambda i: (0, 0)),
            pl.BlockSpec((dh, 1), lambda i: (0, 0)),
            pl.BlockSpec((1, dh), lambda i: (0, 0)),
        ],
        out_specs=(
            pl.BlockSpec((None, inner, hw), lambda i: (i, 0, 0)),
            pl.BlockSpec((None, dh, hw), lambda i: (i, 0, 0)),
            pl.BlockSpec((None, l, dh), lambda i: (i, 0, 0)),
        ),
        compiler_params=_compiler_params(("parallel",)),
    )(x3, h_b, wk_t.astype(mm_dtype), bk_col,
      wv_t.astype(mm_dtype), bv_col, bv_row)


# ----------------------------------------------------------------------------
# Kernel 2: q/k_h projection + all-head attention + residual + prenorm MLP
# ----------------------------------------------------------------------------
def attn_mlp_kernel(h_ref, kxt_ref, vh_ref, vxt_ref, mask_ref,
                    wq_t_ref, bq_ref, wk_t_ref, bk_ref,
                    w1_ref, b1_ref, w2_ref, b2_ref, o_ref,
                    *, heads, dim_head, mm_dtype):
    l, D = h_ref.shape
    inner = heads * dim_head

    # shared un-affined LayerNorm of the query (h) tokens
    hb = h_ref[...].astype(jnp.float32)
    mu = jnp.mean(hb, axis=-1, keepdims=True)
    var = jnp.mean((hb - mu) ** 2, axis=-1, keepdims=True)
    h_hat = ((hb - mu) * jax.lax.rsqrt(var + EPS)).astype(mm_dtype)      # (l, D)

    # q (LN affine + softmax scale folded into Wq) and k for the h tokens
    q = jax.lax.dot_general(h_hat, wq_t_ref[...], (((1,), (1,)), ((), ())),
                            preferred_element_type=jnp.float32)
    q = q + bq_ref[...].astype(jnp.float32)                              # (l, inner)
    k_h = jax.lax.dot_general(h_hat, wk_t_ref[...], (((1,), (1,)), ((), ())),
                              preferred_element_type=jnp.float32)
    k_h = k_h + bk_ref[...].astype(jnp.float32)                          # (l, inner)

    # Stack every head on the sublane axis (row = head*l + query) by masking a
    # replicated q to a block-diagonal layout: ONE MXU matmul computes all
    # heads' scores (M = heads*l instead of l, no 8-lane head slices).
    q_rep = jnp.concatenate([q] * heads, axis=0)                         # (heads*l, inner)
    q_bd = (q_rep * mask_ref[...].astype(jnp.float32)).astype(mm_dtype)

    s_h = jax.lax.dot_general(q_bd, k_h.astype(mm_dtype), (((1,), (1,)), ((), ())),
                              preferred_element_type=jnp.float32)        # (heads*l, l)
    s_x = jnp.dot(q_bd, kxt_ref[...].astype(mm_dtype),
                  preferred_element_type=jnp.float32)                    # (heads*l, hw)

    # exact two-piece softmax over all l+hw keys (no token concat anywhere)
    m = jnp.maximum(jnp.max(s_h, axis=-1, keepdims=True),
                    jnp.max(s_x, axis=-1, keepdims=True))
    p_h = jnp.exp(s_h - m)
    p_x = jnp.exp(s_x - m)
    denom = (jnp.sum(p_h, axis=-1, keepdims=True)
             + jnp.sum(p_x, axis=-1, keepdims=True))

    # single stacked PV matmul (+ the tiny h-key piece), exact normalization
    pv = (jnp.dot(p_h.astype(mm_dtype), vh_ref[...].astype(mm_dtype),
                  preferred_element_type=jnp.float32)
          + jax.lax.dot_general(p_x.astype(mm_dtype), vxt_ref[...].astype(mm_dtype),
                                (((1,), (1,)), ((), ())),
                                preferred_element_type=jnp.float32))     # (heads*l, dh)
    z_st = pv / denom

    # un-stack heads: (heads*l, dh) -> (l, heads*dh)
    z = jnp.concatenate([z_st[hh * l:(hh + 1) * l, :] for hh in range(heads)],
                        axis=-1)                                         # (l, inner)

    z1 = z + hb                                                          # residual 1 (z += h)

    # prenorm (affine folded into w1) + MLP + residual 2
    mu2 = jnp.mean(z1, axis=-1, keepdims=True)
    var2 = jnp.mean((z1 - mu2) ** 2, axis=-1, keepdims=True)
    z_hat = ((z1 - mu2) * jax.lax.rsqrt(var2 + EPS)).astype(mm_dtype)
    h1 = jnp.dot(z_hat, w1_ref[...],
                 preferred_element_type=jnp.float32) + b1_ref[...].astype(jnp.float32)
    # exact GELU (PyTorch nn.GELU default); tanh-approx would move this onto
    # the EUP but changes numerics vs the reference module.
    h1 = 0.5 * h1 * (1.0 + jax.lax.erf(h1 * 0.7071067811865476))
    h2 = jnp.dot(h1.astype(mm_dtype), w2_ref[...],
                 preferred_element_type=jnp.float32) + b2_ref[...].astype(jnp.float32)
    o_ref[...] = (h2 + z1).astype(o_ref.dtype)


def attention_mlp(h_b, k_x_t, v_h, v_x_t, head_mask, wq_t, bq, wk_t, bk,
                  w1, b1, w2, b2, *, heads, dim_head, mm_dtype):
    b, l, D = h_b.shape
    inner, hw = k_x_t.shape[1], k_x_t.shape[2]
    dh = dim_head
    hdim = w1.shape[1]
    kernel = functools.partial(attn_mlp_kernel, heads=heads, dim_head=dim_head,
                               mm_dtype=mm_dtype)
    return pl.pallas_call(
        kernel,
        out_shape=jax.ShapeDtypeStruct((b, l, D), jnp.float32),
        grid=(b,),
        in_specs=[
            pl.BlockSpec((None, l, D), lambda i: (i, 0, 0)),
            pl.BlockSpec((None, inner, hw), lambda i: (i, 0, 0)),
            # resident (constant-index) operands
            pl.BlockSpec((l, dh), lambda i: (0, 0)),
            pl.BlockSpec((dh, hw), lambda i: (0, 0)),
            pl.BlockSpec((heads * l, inner), lambda i: (0, 0)),
            pl.BlockSpec((inner, D), lambda i: (0, 0)),
            pl.BlockSpec((1, inner), lambda i: (0, 0)),
            pl.BlockSpec((inner, D), lambda i: (0, 0)),
            pl.BlockSpec((1, inner), lambda i: (0, 0)),
            pl.BlockSpec((D, hdim), lambda i: (0, 0)),
            pl.BlockSpec((1, hdim), lambda i: (0, 0)),
            pl.BlockSpec((hdim, D), lambda i: (0, 0)),
            pl.BlockSpec((1, D), lambda i: (0, 0)),
        ],
        out_specs=pl.BlockSpec((None, l, D), lambda i: (i, 0, 0)),
        compiler_params=_compiler_params(("parallel",)),
    )(h_b, k_x_t, v_h, v_x_t, head_mask,
      wq_t.astype(mm_dtype), bq, wk_t.astype(mm_dtype), bk,
      w1.astype(mm_dtype), b1, w2.astype(mm_dtype), b2)


# ----------------------------------------------------------------------------
# Full forward (tiny layout glue in plain JAX, hot paths in Pallas)
# ----------------------------------------------------------------------------
def self_attention_forward(x, h, params, heads, dim_head, *, use_bf16=True):
    b, D, hh, ww = x.shape
    l = h.shape[0]
    hw = hh * ww
    inner = heads * dim_head
    assert inner == D, "residual `z += h` requires heads * dim_head == dim"
    scale = dim_head ** (-0.5)
    mm_dtype = jnp.bfloat16 if use_bf16 else jnp.float32
    act_dtype = jnp.bfloat16 if use_bf16 else jnp.float32

    # layout glue: h (l,b,D)->(b,l,D) is tiny; x stays in NCHW — the (b,D,hw)
    # reshape is a free minor-dim collapse, so no big transpose / no concat.
    h_b = jnp.transpose(h, (1, 0, 2)).astype(act_dtype)
    x3 = x.reshape(b, D, hw).astype(act_dtype)

    gq, beq, wq, bq = params["to_q"]
    gk, bek, wk, bk = params["to_k"]
    gv, bev, wv, bv = params["to_v"]
    gm, bem, w1, b1, w2, b2 = params["mlp"]

    # Fold LN affines (and the softmax scale for q, the head-sum for v) into
    # the projection weights so k/v share one un-affined x_hat in-kernel.
    wq_f, bq_f = _fold_ln_linear(gq, beq, wq, bq, extra_scale=scale)
    wk_f, bk_f = _fold_ln_linear(gk, bek, wk, bk)
    wv_sum = wv.reshape(D, heads, dim_head).sum(axis=1)
    bv_sum = bv.reshape(heads, dim_head).sum(axis=0).reshape(1, dim_head)
    wv_f, bv_f = _fold_ln_linear(gv, bev, wv_sum, bv_sum)
    w1_f, b1_f = _fold_ln_linear(gm, bem, w1, b1)          # prenorm folded into MLP

    # kernel 1: x-token k / v (transposed, lane-dense) + h-token v partials
    k_x_t, v_x_t_part, v_h_part = project_kv(
        x3, h_b, wk_f.T, bk_f.T, wv_f.T, bv_f.T, bv_f,
        mm_dtype=mm_dtype, act_dtype=act_dtype)

    # einsum('B Q K, b K d -> B Q d') sums v over batch*head; heads were folded
    # into the weight above, the batch sum is a tiny XLA reduce (the full
    # (b, n, heads*dh) v tensor is never materialized).
    v_x_t = v_x_t_part.sum(axis=0)                          # (dh, hw)
    v_h = v_h_part.sum(axis=0)                              # (l, dh)

    # block-diagonal head mask: row = head*l + query, col = projection column
    head_mask = (jnp.arange(heads * l)[:, None] // l ==
                 jnp.arange(inner)[None, :] // dim_head).astype(jnp.float32)

    # kernel 2: q/k_h projection + attention + residual + prenorm MLP + residual
    out = attention_mlp(h_b, k_x_t, v_h, v_x_t, head_mask,
                        wq_f.T, bq_f, wk_f.T, bk_f,
                        w1_f, b1_f, w2, b2,
                        heads=heads, dim_head=dim_head, mm_dtype=mm_dtype)
    return jnp.transpose(out, (1, 0, 2))                    # (l, b, D)


# ----------------------------------------------------------------------------
# Pure-JAX reference (exact module semantics, for the correctness check)
# ----------------------------------------------------------------------------
def self_attention_reference(x, h, params, heads, dim_head):
    with jax.default_matmul_precision("highest"):
        b, D, hh, ww = x.shape
        l = h.shape[0]
        hw = hh * ww
        scale = dim_head ** (-0.5)

        h_b = jnp.transpose(h, (1, 0, 2))
        x_b = jnp.transpose(x.reshape(b, D, hw), (0, 2, 1))
        y = jnp.concatenate([h_b, x_b], axis=1)             # (b, l+hw, D)

        def lnlin(t, p):
            g, be, w, bias = p
            return _layernorm(t, g[0], be[0]) @ w + bias[0]

        q = lnlin(y, params["to_q"])
        k = lnlin(y, params["to_k"])
        v = lnlin(y, params["to_v"])

        def split_heads(t):
            bb, nn, _ = t.shape
            return jnp.transpose(t.reshape(bb, nn, heads, dim_head),
                                 (0, 2, 1, 3)).reshape(bb * heads, nn, dim_head)

        q, k, v = split_heads(q), split_heads(k), split_heads(v)
        dot = scale * jnp.einsum("bqd,bkd->bqk", q, k)
        att = jax.nn.softmax(dot, axis=-1)
        z = jnp.einsum("BQK,bKd->BQd", att, v)               # v summed over batch*head
        z = jnp.transpose(z.reshape(b, heads, l + hw, dim_head),
                          (0, 2, 1, 3)).reshape(b, l + hw, heads * dim_head)
        z = z[:, :l, :] + h_b
        skip = z
        g, be, w1, b1, w2, b2 = params["mlp"]
        zn = _layernorm(z, g[0], be[0])
        h1 = jax.nn.gelu(zn @ w1 + b1[0], approximate=False)
        z = h1 @ w2 + b2[0] + skip
        return jnp.transpose(z, (1, 0, 2))


# ----------------------------------------------------------------------------
# Deterministic parameter init
# ----------------------------------------------------------------------------
def init_params(key, dim, heads, dim_head):
    inner = heads * dim_head
    keys = jax.random.split(key, 18)

    def lin(kw, kb, fan_in, fan_out):
        w = 0.05 * jax.random.normal(kw, (fan_in, fan_out), jnp.float32)
        bias = 0.05 * jax.random.normal(kb, (1, fan_out), jnp.float32)
        return w, bias

    def ln(kg, kb):
        g = 1.0 + 0.1 * jax.random.normal(kg, (1, dim), jnp.float32)
        be = 0.05 * jax.random.normal(kb, (1, dim), jnp.float32)
        return g, be

    gq, beq = ln(keys[0], keys[1]); wq, bq = lin(keys[2], keys[3], dim, inner)
    gk, bek = ln(keys[4], keys[5]); wk, bk = lin(keys[6], keys[7], dim, inner)
    gv, bev = ln(keys[8], keys[9]); wv, bv = lin(keys[10], keys[11], dim, inner)
    gm, bem = ln(keys[12], keys[13])
    w1, b1 = lin(keys[14], keys[15], dim, 2 * dim)
    w2, b2 = lin(keys[16], keys[17], 2 * dim, dim)

    return {
        "to_q": (gq, beq, wq, bq),      # qkv_bias=True
        "to_k": (gk, bek, wk, bk),
        "to_v": (gv, bev, wv, bv),
        "mlp": (gm, bem, w1, b1, w2, b2),
        # self.proj / self.postnorm are never used in forward -> not created.
    }


if __name__ == "__main__":
    b, dim, heads, dim_head = 2, 32, 4, 8     # heads*dim_head == dim (residual requires it)
    H = W = 16                                # hw = 256 -> 264 key tokens incl. h
    l = 8

    key = jax.random.PRNGKey(0)
    kx, kh, kp = jax.random.split(key, 3)
    x = jax.random.normal(kx, (b, dim, H, W), jnp.float32)    # (b, d, h, w)
    hvec = jax.random.normal(kh, (l, b, dim), jnp.float32)    # (l, b, d)
    params = init_params(kp, dim, heads, dim_head)

    ref = self_attention_reference(x, hvec, params, heads, dim_head)

    # f32 path (exact softmax divide; only reassociation / transcendental diffs)
    out = jax.block_until_ready(
        self_attention_forward(x, hvec, params, heads, dim_head, use_bf16=False))
    assert out.shape == (l, b, dim), out.shape
    err = float(jnp.max(jnp.abs(out - ref)))
    assert err < 2e-3, f"f32 path max abs err {err}"

    # bf16 MXU-operand path (f32 LayerNorm/softmax/GELU, f32 accumulation)
    out_bf16 = jax.block_until_ready(
        self_attention_forward(x, hvec, params, heads, dim_head, use_bf16=True))
    err_bf16 = float(jnp.max(jnp.abs(out_bf16 - ref)))
    assert err_bf16 < 5e-2, f"bf16 path max abs err {err_bf16}"

    print("KERNEL_OK")
</pallas_src>

<mosaic_0001>
module attributes {stable_mosaic.version = 11 : i64} {
  func.func @proj_kv_kernel(%arg0: i32, %arg1: memref<1x32x256xf32, #tpu.memory_space<vmem>>, %arg2: memref<1x8x32xf32, #tpu.memory_space<vmem>>, %arg3: memref<32x32xf32, #tpu.memory_space<vmem>>, %arg4: memref<32x1xf32, #tpu.memory_space<vmem>>, %arg5: memref<8x32xf32, #tpu.memory_space<vmem>>, %arg6: memref<8x1xf32, #tpu.memory_space<vmem>>, %arg7: memref<1x8xf32, #tpu.memory_space<vmem>>, %arg8: memref<1x32x256xf32, #tpu.memory_space<vmem>>, %arg9: memref<1x8x256xf32, #tpu.memory_space<vmem>>, %arg10: memref<1x8x8xf32, #tpu.memory_space<vmem>>) attributes {dimension_semantics = [#tpu.dimension_semantics<parallel>], iteration_bounds = array<i64: 2>, scalar_prefetch = 0 : i64, scratch_operands = 0 : i64, tpu.core_type = #tpu.core_type<tc>, window_params = [{transform_indices = @transform_0, window_bounds = array<i64: 1, 32, 256>}, {transform_indices = @transform_1, window_bounds = array<i64: 1, 8, 32>}, {pipeline_mode = #tpu.pipeline_mode<synchronous>, transform_indices = @transform_2, window_bounds = array<i64: 32, 32>}, {pipeline_mode = #tpu.pipeline_mode<synchronous>, transform_indices = @transform_3, window_bounds = array<i64: 32, 1>}, {pipeline_mode = #tpu.pipeline_mode<synchronous>, transform_indices = @transform_4, window_bounds = array<i64: 8, 32>}, {pipeline_mode = #tpu.pipeline_mode<synchronous>, transform_indices = @transform_5, window_bounds = array<i64: 8, 1>}, {pipeline_mode = #tpu.pipeline_mode<synchronous>, transform_indices = @transform_6, window_bounds = array<i64: 1, 8>}, {transform_indices = @transform_7, window_bounds = array<i64: 1, 32, 256>}, {transform_indices = @transform_8, window_bounds = array<i64: 1, 8, 256>}, {transform_indices = @transform_9, window_bounds = array<i64: 1, 8, 8>}]} {
    %c0 = arith.constant 0 : index
    %c0_0 = arith.constant 0 : index
    %c0_1 = arith.constant 0 : index
    %0 = vector.load %arg1[%c0, %c0_0, %c0_1] : memref<1x32x256xf32, #tpu.memory_space<vmem>>, vector<1x32x256xf32>
    %1 = vector.shape_cast %0 : vector<1x32x256xf32> to vector<32x256xf32>
    %cst = arith.constant dense<0.000000e+00> : vector<256xf32>
    %2 = vector.multi_reduction <add>, %1, %cst [0] : vector<32x256xf32> to vector<256xf32>
    %3 = vector.shape_cast %2 : vector<256xf32> to vector<1x256xf32>
    %cst_2 = arith.constant 3.200000e+01 : f32
    %4 = vector.broadcast %cst_2 : f32 to vector<1x256xf32>
    %5 = arith.divf %3, %4 : vector<1x256xf32>
    %6 = vector.broadcast %5 : vector<1x256xf32> to vector<32x256xf32>
    %7 = arith.subf %1, %6 : vector<32x256xf32>
    %8 = arith.mulf %7, %7 : vector<32x256xf32>
    %cst_3 = arith.constant dense<0.000000e+00> : vector<256xf32>
    %9 = vector.multi_reduction <add>, %8, %cst_3 [0] : vector<32x256xf32> to vector<256xf32>
    %10 = vector.shape_cast %9 : vector<256xf32> to vector<1x256xf32>
    %cst_4 = arith.constant 3.200000e+01 : f32
    %11 = vector.broadcast %cst_4 : f32 to vector<1x256xf32>
    %12 = arith.divf %10, %11 : vector<1x256xf32>
    %13 = vector.broadcast %5 : vector<1x256xf32> to vector<32x256xf32>
    %14 = arith.subf %1, %13 : vector<32x256xf32>
    %cst_5 = arith.constant 9.99999974E-6 : f32
    %15 = vector.broadcast %cst_5 : f32 to vector<1x256xf32>
    %16 = arith.addf %12, %15 : vector<1x256xf32>
    %17 = math.rsqrt %16 : vector<1x256xf32>
    %18 = vector.broadcast %17 : vector<1x256xf32> to vector<32x256xf32>
    %19 = arith.mulf %14, %18 : vector<32x256xf32>
    %c0_6 = arith.constant 0 : index
    %c0_7 = arith.constant 0 : index
    %20 = vector.load %arg3[%c0_6, %c0_7] : memref<32x32xf32, #tpu.memory_space<vmem>>, vector<32x32xf32>
    %cst_8 = arith.constant dense<0.000000e+00> : vector<32x256xf32>
    %21 = tpu.matmul %20, %19, %cst_8 {dimension_numbers = #tpu.dot_dimension_numbers<[1], [0], [0], [1], [0, 0, 1, 1], [], []>} : vector<32x32xf32>, vector<32x256xf32>, vector<32x256xf32> -> vector<32x256xf32>
    %c0_9 = arith.constant 0 : index
    %c0_10 = arith.constant 0 : index
    %22 = vector.load %arg4[%c0_9, %c0_10] : memref<32x1xf32, #tpu.memory_space<vmem>>, vector<32x1xf32>
    %23 = vector.broadcast %22 : vector<32x1xf32> to vector<32x256xf32>
    %24 = arith.addf %21, %23 : vector<32x256xf32>
    %c0_11 = arith.constant 0 : index
    %c0_12 = arith.constant 0 : index
    %c0_13 = arith.constant 0 : index
    %25 = vector.load %arg8[%c0_11, %c0_12, %c0_13] : memref<1x32x256xf32, #tpu.memory_space<vmem>>, vector<1x32x256xf32>
    %26 = vector.shape_cast %25 : vector<1x32x256xf32> to vector<32x256xf32>
    %27 = vector.shape_cast %24 : vector<32x256xf32> to vector<1x32x256xf32>
    tpu.vector_store %arg8[%c0_11, %c0_12, %c0_13], %27 {strides = array<i32>} : memref<1x32x256xf32, #tpu.memory_space<vmem>>, vector<1x32x256xf32>,
    %c0_14 = arith.constant 0 : index
    %c0_15 = arith.constant 0 : index
    %28 = vector.load %arg5[%c0_14, %c0_15] : memref<8x32xf32, #tpu.memory_space<vmem>>, vector<8x32xf32>
    %cst_16 = arith.constant dense<0.000000e+00> : vector<8x256xf32>
    %29 = tpu.matmul %28, %19, %cst_16 {dimension_numbers = #tpu.dot_dimension_numbers<[1], [0], [0], [1], [0, 0, 1, 1], [], []>} : vector<8x32xf32>, vector<32x256xf32>, vector<8x256xf32> -> vector<8x256xf32>
    %c0_17 = arith.constant 0 : index
    %c0_18 = arith.constant 0 : index
    %30 = vector.load %arg6[%c0_17, %c0_18] : memref<8x1xf32, #tpu.memory_space<vmem>>, vector<8x1xf32>
    %31 = vector.broadcast %30 : vector<8x1xf32> to vector<8x256xf32>
    %32 = arith.addf %29, %31 : vector<8x256xf32>
    %c0_19 = arith.constant 0 : index
    %c0_20 = arith.constant 0 : index
    %c0_21 = arith.constant 0 : index
    %33 = vector.load %arg9[%c0_19, %c0_20, %c0_21] : memref<1x8x256xf32, #tpu.memory_space<vmem>>, vector<1x8x256xf32>
    %34 = vector.shape_cast %33 : vector<1x8x256xf32> to vector<8x256xf32>
    %35 = vector.shape_cast %32 : vector<8x256xf32> to vector<1x8x256xf32>
    tpu.vector_store %arg9[%c0_19, %c0_20, %c0_21], %35 {strides = array<i32>} : memref<1x8x256xf32, #tpu.memory_space<vmem>>, vector<1x8x256xf32>,
    %c0_22 = arith.constant 0 : index
    %c0_23 = arith.constant 0 : index
    %c0_24 = arith.constant 0 : index
    %36 = vector.load %arg2[%c0_22, %c0_23, %c0_24] : memref<1x8x32xf32, #tpu.memory_space<vmem>>, vector<1x8x32xf32>
    %37 = vector.shape_cast %36 : vector<1x8x32xf32> to vector<8x32xf32>
    %cst_25 = arith.constant dense<0.000000e+00> : vector<8xf32>
    %38 = vector.multi_reduction <add>, %37, %cst_25 [1] : vector<8x32xf32> to vector<8xf32>
    %39 = vector.shape_cast %38 : vector<8xf32> to vector<8x1xf32>
    %cst_26 = arith.constant 3.200000e+01 : f32
    %40 = vector.broadcast %cst_26 : f32 to vector<8x1xf32>
    %41 = arith.divf %39, %40 : vector<8x1xf32>
    %42 = vector.broadcast %41 : vector<8x1xf32> to vector<8x32xf32>
    %43 = arith.subf %37, %42 : vector<8x32xf32>
    %44 = arith.mulf %43, %43 : vector<8x32xf32>
    %cst_27 = arith.constant dense<0.000000e+00> : vector<8xf32>
    %45 = vector.multi_reduction <add>, %44, %cst_27 [1] : vector<8x32xf32> to vector<8xf32>
    %46 = vector.shape_cast %45 : vector<8xf32> to vector<8x1xf32>
    %cst_28 = arith.constant 3.200000e+01 : f32
    %47 = vector.broadcast %cst_28 : f32 to vector<8x1xf32>
    %48 = arith.divf %46, %47 : vector<8x1xf32>
    %49 = vector.broadcast %41 : vector<8x1xf32> to vector<8x32xf32>
    %50 = arith.subf %37, %49 : vector<8x32xf32>
    %cst_29 = arith.constant 9.99999974E-6 : f32
    %51 = vector.broadcast %cst_29 : f32 to vector<8x1xf32>
    %52 = arith.addf %48, %51 : vector<8x1xf32>
    %53 = math.rsqrt %52 : vector<8x1xf32>
    %54 = vector.broadcast %53 : vector<8x1xf32> to vector<8x32xf32>
    %55 = arith.mulf %50, %54 : vector<8x32xf32>
    %c0_30 = arith.constant 0 : index
    %c0_31 = arith.constant 0 : index
    %56 = vector.load %arg5[%c0_30, %c0_31] : memref<8x32xf32, #tpu.memory_space<vmem>>, vector<8x32xf32>
    %cst_32 = arith.constant dense<0.000000e+00> : vector<8x8xf32>
    %57 = tpu.matmul %55, %56, %cst_32 {dimension_numbers = #tpu.dot_dimension_numbers<[1], [1], [0], [0], [0, 0, 1, 0], [], []>} : vector<8x32xf32>, vector<8x32xf32>, vector<8x8xf32> -> vector<8x8xf32>
    %c0_33 = arith.constant 0 : index
    %c0_34 = arith.constant 0 : index
    %58 = vector.load %arg7[%c0_33, %c0_34] : memref<1x8xf32, #tpu.memory_space<vmem>>, vector<1x8xf32>
    %59 = vector.broadcast %58 : vector<1x8xf32> to vector<8x8xf32>
    %60 = arith.addf %57, %59 : vector<8x8xf32>
    %c0_35 = arith.constant 0 : index
    %c0_36 = arith.constant 0 : index
    %c0_37 = arith.constant 0 : index
    %61 = vector.load %arg10[%c0_35, %c0_36, %c0_37] : memref<1x8x8xf32, #tpu.memory_space<vmem>>, vector<1x8x8xf32>
    %62 = vector.shape_cast %61 : vector<1x8x8xf32> to vector<8x8xf32>
    %63 = vector.shape_cast %60 : vector<8x8xf32> to vector<1x8x8xf32>
    tpu.vector_store %arg10[%c0_35, %c0_36, %c0_37], %63 {strides = array<i32>} : memref<1x8x8xf32, #tpu.memory_space<vmem>>, vector<1x8x8xf32>,
    return
  }
  func.func @transform_0(%arg0: i32) -> (i32, i32, i32) {
    %c0_i32 = arith.constant 0 : i32
    %c0_i32_0 = arith.constant 0 : i32
    %c0_i32_1 = arith.constant 0 : i32
    return %arg0, %c0_i32, %c0_i32_0 : i32, i32, i32
  }
  func.func @transform_1(%arg0: i32) -> (i32, i32, i32) {
    %c0_i32 = arith.constant 0 : i32
    %c0_i32_0 = arith.constant 0 : i32
    %c0_i32_1 = arith.constant 0 : i32
    return %arg0, %c0_i32, %c0_i32_0 : i32, i32, i32
  }
  func.func @transform_2(%arg0: i32) -> (i32, i32) {
    %c0_i32 = arith.constant 0 : i32
    %c0_i32_0 = arith.constant 0 : i32
    %c0_i32_1 = arith.constant 0 : i32
    return %c0_i32, %c0_i32_0 : i32, i32
  }
  func.func @transform_3(%arg0: i32) -> (i32, i32) {
    %c0_i32 = arith.constant 0 : i32
    %c0_i32_0 = arith.constant 0 : i32
    %c0_i32_1 = arith.constant 0 : i32
    return %c0_i32, %c0_i32_0 : i32, i32
  }
  func.func @transform_4(%arg0: i32) -> (i32, i32) {
    %c0_i32 = arith.constant 0 : i32
    %c0_i32_0 = arith.constant 0 : i32
    %c0_i32_1 = arith.constant 0 : i32
    return %c0_i32, %c0_i32_0 : i32, i32
  }
  func.func @transform_5(%arg0: i32) -> (i32, i32) {
    %c0_i32 = arith.constant 0 : i32
    %c0_i32_0 = arith.constant 0 : i32
    %c0_i32_1 = arith.constant 0 : i32
    return %c0_i32, %c0_i32_0 : i32, i32
  }
  func.func @transform_6(%arg0: i32) -> (i32, i32) {
    %c0_i32 = arith.constant 0 : i32
    %c0_i32_0 = arith.constant 0 : i32
    %c0_i32_1 = arith.constant 0 : i32
    return %c0_i32, %c0_i32_0 : i32, i32
  }
  func.func @transform_7(%arg0: i32) -> (i32, i32, i32) {
    %c0_i32 = arith.constant 0 : i32
    %c0_i32_0 = arith.constant 0 : i32
    %c0_i32_1 = arith.constant 0 : i32
    return %arg0, %c0_i32, %c0_i32_0 : i32, i32, i32
  }
  func.func @transform_8(%arg0: i32) -> (i32, i32, i32) {
    %c0_i32 = arith.constant 0 : i32
    %c0_i32_0 = arith.constant 0 : i32
    %c0_i32_1 = arith.constant 0 : i32
    return %arg0, %c0_i32, %c0_i32_0 : i32, i32, i32
  }
  func.func @transform_9(%arg0: i32) -> (i32, i32, i32) {
    %c0_i32 = arith.constant 0 : i32
    %c0_i32_0 = arith.constant 0 : i32
    %c0_i32_1 = arith.constant 0 : i32
    return %arg0, %c0_i32, %c0_i32_0 : i32, i32, i32
  }
}

</mosaic_0001>

<llo_original>
// kernel: tpu_custom_call.1
$region0: #{tpu_custom_call.1}
  #allocation0 [shape = 'u32[]', space=smem, size = 0x4, offset = 0x4, fixed_abs, tag = 'smem constant byte address 0x4 - core index']
  #allocation1 [shape = 'u32[144,128]{1,0:T(1,128)}', space=vmem, size = 0x12000, scoped, tag = 'internal scratch']
  %s0 = inlined_call_operand.hbm [shape: f32[2,32,256], index: 0, kind: input, shape index: {}]
  %s1 = inlined_call_operand.hbm [shape: f32[2,8,32], index: 1, kind: input, shape index: {}]
  %s2 = inlined_call_operand.hbm [shape: f32[32,32], index: 2, kind: input, shape index: {}]
  %s3 = inlined_call_operand.hbm [shape: f32[32,1], index: 3, kind: input, shape index: {}]
  %s4 = inlined_call_operand.hbm [shape: f32[8,32], index: 4, kind: input, shape index: {}]
  %s5 = inlined_call_operand.hbm [shape: f32[8,1], index: 5, kind: input, shape index: {}]
  %s6 = inlined_call_operand.hbm [shape: f32[1,8], index: 6, kind: input, shape index: {}]
  %s7 = inlined_call_operand.hbm [shape: f32[2,32,256], index: 7, kind: output, shape index: {0}]
  %s8 = inlined_call_operand.hbm [shape: f32[2,8,256], index: 8, kind: output, shape index: {1}]
  %s9 = inlined_call_operand.hbm [shape: f32[2,8,8], index: 9, kind: output, shape index: {2}]
  %10 = xla_tuple %s7, %s8, %s9
  %s11 = sld [smem:[#allocation0]]
  $region105: #{tpu_custom_call.1} parent=0
    _
  %s13 = ssub.s32 1, %s11
  %s14 = scalar_select 0, %s13, %s11
  $region1: #{tpu_custom_call.1} parent=0
    #allocation2 [shape = 'u8[65536]{0}', space=vmem, size = 0x10000, scoped, tag = 'input window, operand 0']
    #allocation3 [shape = 's32[2]{0}', space=sflag, size = 0x8, scoped, tag = 'scoped memory for tpu_custom_call.1']
    #allocation4 [shape = 's32[2]{0}', space=sflag, size = 0x8, scoped, tag = 'scoped memory for tpu_custom_call.1']
    #allocation5 [shape = 'u8[8192]{0}', space=vmem, size = 0x2000, scoped, tag = 'input window, operand 1']
    #allocation6 [shape = 's32[2]{0}', space=sflag, size = 0x8, scoped, tag = 'scoped memory for tpu_custom_call.1']
    #allocation7 [shape = 'u8[16384]{0}', space=vmem, size = 0x4000, scoped, tag = 'input window, operand 2, single buffered']
    #allocation8 [shape = 'u8[16384]{0}', space=vmem, size = 0x4000, scoped, tag = 'input window, operand 3, single buffered']
    #allocation9 [shape = 's32[1]{0}', space=sflag, size = 0x4, scoped, tag = 'scoped memory for tpu_custom_call.1']
    #allocation10 [shape = 'u8[4096]{0}', space=vmem, size = 0x1000, scoped, tag = 'input window, operand 4, single buffered']
    #allocation11 [shape = 'u8[4096]{0}', space=vmem, size = 0x1000, scoped, tag = 'input window, operand 5, single buffered']
    #allocation12 [shape = 's32[1]{0}', space=sflag, size = 0x4, scoped, tag = 'scoped memory for tpu_custom_call.1']
    #allocation13 [shape = 'u8[512]{0}', space=vmem, size = 0x400, scoped, tag = 'input window, operand 6, single buffered']
    #allocation14 [shape = 'u8[65536]{0}', space=vmem, size = 0x10000, scoped, tag = 'output window, operand 0']
    #allocation15 [shape = 'u8[16384]{0}', space=vmem, size = 0x4000, scoped, tag = 'output window, operand 1']
    #allocation16 [shape = 's32[2]{0}', space=sflag, size = 0x8, scoped, tag = 'scoped memory for tpu_custom_call.1']
    #allocation17 [shape = 'u8[8192]{0}', space=vmem, size = 0x2000, scoped, tag = 'output window, operand 2']
    %15 = vsyncpa [#allocation3], 0
    %s16 = scalar_lea.sflag [#allocation3], 1
    %17 = vsyncpa %s16, 0
    %18 = vsyncpa [#allocation6], 0
    %s19 = scalar_lea.sflag [#allocation6], 1
    %20 = vsyncpa %s19, 0
    %21 = vsyncpa [#allocation9], 0
    %22 = vsyncpa [#allocation12], 0
    %23 = vsyncpa [#allocation4], 0
    %s24 = scalar_lea.sflag [#allocation4], 1
    %25 = vsyncpa %s24, 0
    %26 = vsyncpa [#allocation16], 0
    %s27 = scalar_lea.sflag [#allocation16], 1
    %28 = vsyncpa %s27, 0
    loop: start=0, step=1, limit=4
    $region2: #{tpu_custom_call.1} parent=1 // loop_pre_header
      _
    $region3: #{tpu_custom_call.1} parent=1 // loop_header
      %s30 = sphi 0, %s34
      %p31 = scmp.ge.s32.totalorder %s30, 4
      %s40 = sphi 0, %s42
      %s43 = sphi 0, %s40
      %s44 = sphi 0, %s43
      %s60 = sphi 0, %s44
      %s66 = sphi 0, %s68
      %s69 = sphi 0, %s66
      %s70 = sphi 0, %s69
      %s86 = sphi 0, %s70
      %s90 = sphi 0, %s90
      %s92 = sphi 0, %s90
      %s93 = sphi 0, %s92
      %s107 = sphi 0, %s93
      %s111 = sphi 0, %s111
      %s113 = sphi 0, %s111
      %s114 = sphi 0, %s113
      %s128 = sphi 0, %s114
      %s132 = sphi 0, %s132
      %s134 = sphi 0, %s132
      %s135 = sphi 0, %s134
      %s149 = sphi 0, %s135
      %s153 = sphi 0, %s153
      %s155 = sphi 0, %s153
      %s156 = sphi 0, %s155
      %s170 = sphi 0, %s156
      %s174 = sphi 0, %s174
      %s176 = sphi 0, %s174
      %s177 = sphi 0, %s176
      %s191 = sphi 0, %s177
      %s197 = sphi 0, %s199
      %s200 = sphi 0, %s197
      %s201 = sphi 0, %s200
      %s217 = sphi 0, %s201
      %s223 = sphi 0, %s225
      %s226 = sphi 0, %s223
      %s227 = sphi 0, %s226
      %s243 = sphi 0, %s227
      %s249 = sphi 0, %s251
      %s252 = sphi 0, %s249
      %s253 = sphi 0, %s252
      %s269 = sphi 0, %s253
    $region4: #{tpu_custom_call.1} parent=1 // loop_header_branch
      %33 = sbr.rel (%p31) target = $region8
    $region5: #{tpu_custom_call.1} parent=1 // loop_body
      %s35 = ssub.s32 %s30, 1
      %s36 = ssub.s32 %s30, 2
      %s37 = sadd.s32 %s30, 1
      %s38 = ssub.s32 %s30, %s37
      %p39 = scmp.eq.s32.totalorder %s38, 0
      %s41 = sadd.s32 %s40, 1
      %s42 = scalar_select %p39, %s40, %s41
      %p45 = pneg %p39
      %p46 = scmp.eq.s32.totalorder %s30, 1
      %p47 = por %p45, %p46
      %p48 = scmp.ne.s32.totalorder %s40, %s43
      %p49 = scmp.eq.s32.totalorder %s30, 0
      %p50 = por %p48, %p49
      %p51 = scmp.ne.s32.totalorder %s40, %s43
      %p52 = scmp.eq.s32.totalorder %s35, 1
      %p53 = por %p51, %p52
      %p54 = scmp.ne.s32.totalorder %s43, %s44
      %p55 = scmp.eq.s32.totalorder %s35, 0
      %p56 = por %p54, %p55
      %p57 = scmp.ne.s32.totalorder %s43, %s44
      %p58 = scmp.eq.s32.totalorder %s36, 1
      %p59 = por %p57, %p58
      %p61 = scmp.ne.s32.totalorder %s44, %s60
      %p62 = scmp.eq.s32.totalorder %s36, 0
      %p63 = por %p61, %p62
      %s64 = ssub.s32 %s30, %s37
      %p65 = scmp.eq.s32.totalorder %s64, 0
      %s67 = sadd.s32 %s66, 1
      %s68 = scalar_select %p65, %s66, %s67
      %p71 = pneg %p65
      %p72 = scmp.eq.s32.totalorder %s30, 1
      %p73 = por %p71, %p72
      %p74 = scmp.ne.s32.totalorder %s66, %s69
      %p75 = scmp.eq.s32.totalorder %s30, 0
      %p76 = por %p74, %p75
      %p77 = scmp.ne.s32.totalorder %s66, %s69
      %p78 = scmp.eq.s32.totalorder %s35, 1
      %p79 = por %p77, %p78
      %p80 = scmp.ne.s32.totalorder %s69, %s70
      %p81 = scmp.eq.s32.totalorder %s35, 0
      %p82 = por %p80, %p81
      %p83 = scmp.ne.s32.totalorder %s69, %s70
      %p84 = scmp.eq.s32.totalorder %s36, 1
      %p85 = por %p83, %p84
      %p87 = scmp.ne.s32.totalorder %s70, %s86
      %p88 = scmp.eq.s32.totalorder %s36, 0
      %p89 = por %p87, %p88
      %s91 = sadd.s32 %s90, 1
      %p94 = scmp.eq.s32.totalorder %s30, 1
      %p95 = scmp.ne.s32.totalorder %s90, %s92
      %p96 = scmp.eq.s32.totalorder %s30, 0
      %p97 = por %p95, %p96
      %p98 = scmp.ne.s32.totalorder %s90, %s92
      %p99 = scmp.eq.s32.totalorder %s35, 1
      %p100 = por %p98, %p99
      %p101 = scmp.ne.s32.totalorder %s92, %s93
      %p102 = scmp.eq.s32.totalorder %s35, 0
      %p103 = por %p101, %p102
      %p104 = scmp.ne.s32.totalorder %s92, %s93
      %p105 = scmp.eq.s32.totalorder %s36, 1
      %p106 = por %p104, %p105
      %p108 = scmp.ne.s32.totalorder %s93, %s107
      %p109 = scmp.eq.s32.totalorder %s36, 0
      %p110 = por %p108, %p109
      %s112 = sadd.s32 %s111, 1
      %p115 = scmp.eq.s32.totalorder %s30, 1
      %p116 = scmp.ne.s32.totalorder %s111, %s113
      %p117 = scmp.eq.s32.totalorder %s30, 0
      %p118 = por %p116, %p117
      %p119 = scmp.ne.s32.totalorder %s111, %s113
      %p120 = scmp.eq.s32.totalorder %s35, 1
      %p121 = por %p119, %p120
      %p122 = scmp.ne.s32.totalorder %s113, %s114
      %p123 = scmp.eq.s32.totalorder %s35, 0
      %p124 = por %p122, %p123
      %p125 = scmp.ne.s32.totalorder %s113, %s114
      %p126 = scmp.eq.s32.totalorder %s36, 1
      %p127 = por %p125, %p126
      %p129 = scmp.ne.s32.totalorder %s114, %s128
      %p130 = scmp.eq.s32.totalorder %s36, 0
      %p131 = por %p129, %p130
      %s133 = sadd.s32 %s132, 1
      %p136 = scmp.eq.s32.totalorder %s30, 1
      %p137 = scmp.ne.s32.totalorder %s132, %s134
      %p138 = scmp.eq.s32.totalorder %s30, 0
      %p139 = por %p137, %p138
      %p140 = scmp.ne.s32.totalorder %s132, %s134
      %p141 = scmp.eq.s32.totalorder %s35, 1
      %p142 = por %p140, %p141
      %p143 = scmp.ne.s32.totalorder %s134, %s135
      %p144 = scmp.eq.s32.totalorder %s35, 0
      %p145 = por %p143, %p144
      %p146 = scmp.ne.s32.totalorder %s134, %s135
      %p147 = scmp.eq.s32.totalorder %s36, 1
      %p148 = por %p146, %p147
      %p150 = scmp.ne.s32.totalorder %s135, %s149
      %p151 = scmp.eq.s32.totalorder %s36, 0
      %p152 = por %p150, %p151
      %s154 = sadd.s32 %s153, 1
      %p157 = scmp.eq.s32.totalorder %s30, 1
      %p158 = scmp.ne.s32.totalorder %s153, %s155
      %p159 = scmp.eq.s32.totalorder %s30, 0
      %p160 = por %p158, %p159
      %p161 = scmp.ne.s32.totalorder %s153, %s155
      %p162 = scmp.eq.s32.totalorder %s35, 1
      %p163 = por %p161, %p162
      %p164 = scmp.ne.s32.totalorder %s155, %s156
      %p165 = scmp.eq.s32.totalorder %s35, 0
      %p166 = por %p164, %p165
      %p167 = scmp.ne.s32.totalorder %s155, %s156
      %p168 = scmp.eq.s32.totalorder %s36, 1
      %p169 = por %p167, %p168
      %p171 = scmp.ne.s32.totalorder %s156, %s170
      %p172 = scmp.eq.s32.totalorder %s36, 0
      %p173 = por %p171, %p172
      %s175 = sadd.s32 %s174, 1
      %p178 = scmp.eq.s32.totalorder %s30, 1
      %p179 = scmp.ne.s32.totalorder %s174, %s176
      %p180 = scmp.eq.s32.totalorder %s30, 0
      %p181 = por %p179, %p180
      %p182 = scmp.ne.s32.totalorder %s174, %s176
      %p183 = scmp.eq.s32.totalorder %s35, 1
      %p184 = por %p182, %p183
      %p185 = scmp.ne.s32.totalorder %s176, %s177
      %p186 = scmp.eq.s32.totalorder %s35, 0
      %p187 = por %p185, %p186
      %p188 = scmp.ne.s32.totalorder %s176, %s177
      %p189 = scmp.eq.s32.totalorder %s36, 1
      %p190 = por %p188, %p189
      %p192 = scmp.ne.s32.totalorder %s177, %s191
      %p193 = scmp.eq.s32.totalorder %s36, 0
      %p194 = por %p192, %p193
      %s195 = ssub.s32 %s30, %s37
      %p196 = scmp.eq.s32.totalorder %s195, 0
      %s198 = sadd.s32 %s197, 1
      %s199 = scalar_select %p196, %s197, %s198
      %p202 = pneg %p196
      %p203 = scmp.eq.s32.totalorder %s30, 1
      %p204 = por %p202, %p203
      %p205 = scmp.ne.s32.totalorder %s197, %s200
      %p206 = scmp.eq.s32.totalorder %s30, 0
      %p207 = por %p205, %p206
      %p208 = scmp.ne.s32.totalorder %s197, %s200
      %p209 = scmp.eq.s32.totalorder %s35, 1
      %p210 = por %p208, %p209
      %p211 = scmp.ne.s32.totalorder %s200, %s201
      %p212 = scmp.eq.s32.totalorder %s35, 0
      %p213 = por %p211, %p212
      %p214 = scmp.ne.s32.totalorder %s200, %s201
      %p215 = scmp.eq.s32.totalorder %s36, 1
      %p216 = por %p214, %p215
      %p218 = scmp.ne.s32.totalorder %s201, %s217
      %p219 = scmp.eq.s32.totalorder %s36, 0
      %p220 = por %p218, %p219
      %s221 = ssub.s32 %s30, %s37
      %p222 = scmp.eq.s32.totalorder %s221, 0
      %s224 = sadd.s32 %s223, 1
      %s225 = scalar_select %p222, %s223, %s224
      %p228 = pneg %p222
      %p229 = scmp.eq.s32.totalorder %s30, 1
      %p230 = por %p228, %p229
      %p231 = scmp.ne.s32.totalorder %s223, %s226
      %p232 = scmp.eq.s32.totalorder %s30, 0
      %p233 = por %p231, %p232
      %p234 = scmp.ne.s32.totalorder %s223, %s226
      %p235 = scmp.eq.s32.totalorder %s35, 1
      %p236 = por %p234, %p235
      %p237 = scmp.ne.s32.totalorder %s226, %s227
      %p238 = scmp.eq.s32.totalorder %s35, 0
      %p239 = por %p237, %p238
      %p240 = scmp.ne.s32.totalorder %s226, %s227
      %p241 = scmp.eq.s32.totalorder %s36, 1
      %p242 = por %p240, %p241
      %p244 = scmp.ne.s32.totalorder %s227, %s243
      %p245 = scmp.eq.s32.totalorder %s36, 0
      %p246 = por %p244, %p245
      %s247 = ssub.s32 %s30, %s37
      %p248 = scmp.eq.s32.totalorder %s247, 0
      %s250 = sadd.s32 %s249, 1
      %s251 = scalar_select %p248, %s249, %s250
      %p254 = pneg %p248
      %p255 = scmp.eq.s32.totalorder %s30, 1
      %p256 = por %p254, %p255
      %p257 = scmp.ne.s32.totalorder %s249, %s252
      %p258 = scmp.eq.s32.totalorder %s30, 0
      %p259 = por %p257, %p258
      %p260 = scmp.ne.s32.totalorder %s249, %s252
      %p261 = scmp.eq.s32.totalorder %s35, 1
      %p262 = por %p260, %p261
      %p263 = scmp.ne.s32.totalorder %s252, %s253
      %p264 = scmp.eq.s32.totalorder %s35, 0
      %p265 = por %p263, %p264
      %p266 = scmp.ne.s32.totalorder %s252, %s253
      %p267 = scmp.eq.s32.totalorder %s36, 1
      %p268 = por %p266, %p267
      %p270 = scmp.ne.s32.totalorder %s253, %s269
      %p271 = scmp.eq.s32.totalorder %s36, 0
      %p272 = por %p270, %p271
      %p273 = scmp.le.s32.totalorder 1, %s30
      %p274 = scmp.lt.s32.totalorder %s30, 3
      %p275 = pnand %p273, %p274
      %p276 = pneg %p275
      // Predicated region
      $region9: #{tpu_custom_call.1} parent=5 // pred_check
        _
      $region10: #{tpu_custom_call.1} parent=5 // pred_check_branch
        %278 = sbr.rel (%p275) target = $region12
      $region11: #{tpu_custom_call.1} parent=5 // pred_region
        %s279 = ssub.s32 %s30, 1
        // Predicated region
        $region13: #{tpu_custom_call.1} parent=11 // pred_check
          %p280 = pneg %p103
        $region14: #{tpu_custom_call.1} parent=11 // pred_check_branch
          %282 = sbr.rel (%p280) target = $region16
        $region15: #{tpu_custom_call.1} parent=11 // pred_region
          %s284 = ssub.s32 512, 512
          %285 = vsyncadd [#allocation6], %s284
          %s286 = sshll.u32 [#allocation7], 4
          %s287 = int_to_ptr.vmem [resolvable:$true] %s286
          %292 = dma.hbm_to_vmem [thread:$0]  %s2, 512, %s287, [#allocation6], 128, 128, 8
        $region16: #{tpu_custom_call.1} parent=11 // pred_fallthru
          _
        // Predicated region
        $region17: #{tpu_custom_call.1} parent=11 // pred_check
          %p293 = pneg %p124
        $region18: #{tpu_custom_call.1} parent=11 // pred_check_branch
          %295 = sbr.rel (%p293) target = $region20
        $region19: #{tpu_custom_call.1} parent=11 // pred_region
          %s297 = ssub.s32 512, 512
          %298 = vsyncadd [#allocation9], %s297
          %s299 = sshll.u32 [#allocation8], 4
          %s300 = int_to_ptr.vmem [resolvable:$true] %s299
          %305 = dma.hbm_to_vmem [thread:$0]  %s3, 512, %s300, [#allocation9], 128, 128, 8
        $region20: #{tpu_custom_call.1} parent=11 // pred_fallthru
          _
        // Predicated region
        $region21: #{tpu_custom_call.1} parent=11 // pred_check
          %p306 = pneg %p145
        $region22: #{tpu_custom_call.1} parent=11 // pred_check_branch
          %308 = sbr.rel (%p306) target = $region24
        $region23: #{tpu_custom_call.1} parent=11 // pred_region
          %s310 = ssub.s32 128, 128
          %311 = vsyncadd [#allocation9], %s310
          %s313 = sshll.u32 [#allocation10], 4
          %s314 = int_to_ptr.vmem [resolvable:$true] %s313
          %316 = dma.hbm_to_vmem [thread:$0]  %s4, 128, %s314, [#allocation9]
        $region24: #{tpu_custom_call.1} parent=11 // pred_fallthru
          _
        // Predicated region
        $region25: #{tpu_custom_call.1} parent=11 // pred_check
          %p317 = pneg %p166
        $region26: #{tpu_custom_call.1} parent=11 // pred_check_branch
          %319 = sbr.rel (%p317) target = $region28
        $region27: #{tpu_custom_call.1} parent=11 // pred_region
          %s321 = ssub.s32 128, 128
          %322 = vsyncadd [#allocation12], %s321
          %s324 = sshll.u32 [#allocation11], 4
          %s325 = int_to_ptr.vmem [resolvable:$true] %s324
          %327 = dma.hbm_to_vmem [thread:$0]  %s5, 128, %s325, [#allocation12]
        $region28: #{tpu_custom_call.1} parent=11 // pred_fallthru
          _
        // Predicated region
        $region29: #{tpu_custom_call.1} parent=11 // pred_check
          %p328 = pneg %p187
        $region30: #{tpu_custom_call.1} parent=11 // pred_check_branch
          %330 = sbr.rel (%p328) target = $region32
        $region31: #{tpu_custom_call.1} parent=11 // pred_region
          %s332 = ssub.s32 16, 16
          %333 = vsyncadd [#allocation12], %s332
          %s335 = sshll.u32 [#allocation13], 4
          %s336 = int_to_ptr.vmem [resolvable:$true] %s335
          %338 = dma.hbm_to_vmem [thread:$0]  %s6, 16, %s336, [#allocation12]
        $region32: #{tpu_custom_call.1} parent=11 // pred_fallthru
          _
      $region12: #{tpu_custom_call.1} parent=5 // pred_fallthru
        _
      %p339 = scmp.lt.s32.totalorder %s30, 2
      // Predicated region
      $region33: #{tpu_custom_call.1} parent=5 // pred_check
        %p340 = pneg %p339
      $region34: #{tpu_custom_call.1} parent=5 // pred_check_branch
        %342 = sbr.rel (%p340) target = $region36
      $region35: #{tpu_custom_call.1} parent=5 // pred_region
        // Predicated region
        $region37: #{tpu_custom_call.1} parent=35 // pred_check
          %p343 = pneg %p50
        $region38: #{tpu_custom_call.1} parent=35 // pred_check_branch
          %345 = sbr.rel (%p343) target = $region40
        $region39: #{tpu_custom_call.1} parent=35 // pred_region
          %s346 = sand.u32 %s40, 1
          %s347 = scalar_lea.sflag [#allocation3], %s346
          %s348 = sand.u32 %s40, 1
          %s349 = smul.addr %s348, 64
          %s350 = scalar_lea.vmem [#allocation2], %s349
          %s352 = ssub.s32 1024, 1024
          %353 = vsyncadd %s347, %s352
          %s354 = smul.addr %s30, 8
          %s355 = smul.addr %s354, 128
          %s356 = scalar_lea.hbm %s0, %s355
          %s357 = sshll.u32 %s350, 4
          %s358 = int_to_ptr.vmem [resolvable:$true] %s357
          %363 = dma.hbm_to_vmem [thread:$0]  %s356, 1024, %s358, %s347, 256, 256, 16
        $region40: #{tpu_custom_call.1} parent=35 // pred_fallthru
          _
        // Predicated region
        $region41: #{tpu_custom_call.1} parent=35 // pred_check
          %p364 = pneg %p76
        $region42: #{tpu_custom_call.1} parent=35 // pred_check_branch
          %366 = sbr.rel (%p364) target = $region44
        $region43: #{tpu_custom_call.1} parent=35 // pred_region
          %s367 = sand.u32 %s30, 1
          %s368 = scalar_lea.sflag [#allocation6], %s367
          %s369 = sand.u32 %s66, 1
          %s370 = smul.addr %s369, 8
          %s371 = scalar_lea.vmem [#allocation5], %s370
          %s373 = ssub.s32 128, 128
          %374 = vsyncadd %s368, %s373
          %s375 = smul.addr %s30, 128
          %s376 = scalar_lea.hbm %s1, %s375
          %s378 = sshll.u32 %s371, 4
          %s379 = int_to_ptr.vmem [resolvable:$true] %s378
          %381 = dma.hbm_to_vmem [thread:$0]  %s376, 128, %s379, %s368
        $region44: #{tpu_custom_call.1} parent=35 // pred_fallthru
          _
      $region36: #{tpu_custom_call.1} parent=5 // pred_fallthru
        _
      %p382 = scmp.le.s32.totalorder 1, %s30
      %p383 = scmp.lt.s32.totalorder %s30, 3
      %p384 = pnand %p382, %p383
      %p385 = pneg %p384
      // Predicated region
      $region45: #{tpu_custom_call.1} parent=5 // pred_check
        _
      $region46: #{tpu_custom_call.1} parent=5 // pred_check_branch
        %387 = sbr.rel (%p384) target = $region48
      $region47: #{tpu_custom_call.1} parent=5 // pred_region
        %s388 = ssub.s32 %s30, 1
        %s389 = sand.u32 %s43, 1
        %s390 = scalar_lea.sflag [#allocation3], %s389
        %s391 = sand.u32 %s43, 1
        %s392 = smul.addr %s391, 64
        %s393 = scalar_lea.vmem [#allocation2], %s392
        // Predicated region
        $region49: #{tpu_custom_call.1} parent=47 // pred_check
          %p394 = pneg %p56
        $region50: #{tpu_custom_call.1} parent=47 // pred_check_branch
          %396 = sbr.rel (%p394) target = $region52
        $region51: #{tpu_custom_call.1} parent=47 // pred_region
          %397 = dma.done %s390, 1024
        $region52: #{tpu_custom_call.1} parent=47 // pred_fallthru
          _
        %s398 = sand.u32 %s35, 1
        %s399 = scalar_lea.sflag [#allocation6], %s398
        %s400 = sand.u32 %s69, 1
        %s401 = smul.addr %s400, 8
        %s402 = scalar_lea.vmem [#allocation5], %s401
        // Predicated region
        $region53: #{tpu_custom_call.1} parent=47 // pred_check
          %p403 = pneg %p82
        $region54: #{tpu_custom_call.1} parent=47 // pred_check_branch
          %405 = sbr.rel (%p403) target = $region56
        $region55: #{tpu_custom_call.1} parent=47 // pred_region
          %406 = dma.done %s399, 128
        $region56: #{tpu_custom_call.1} parent=47 // pred_fallthru
          _
        // Predicated region
        $region57: #{tpu_custom_call.1} parent=47 // pred_check
          %p407 = pneg %p103
        $region58: #{tpu_custom_call.1} parent=47 // pred_check_branch
          %409 = sbr.rel (%p407) target = $region60
        $region59: #{tpu_custom_call.1} parent=47 // pred_region
          %410 = dma.done [#allocation6], 512
        $region60: #{tpu_custom_call.1} parent=47 // pred_fallthru
          _
        // Predicated region
        $region61: #{tpu_custom_call.1} parent=47 // pred_check
          %p411 = pneg %p124
        $region62: #{tpu_custom_call.1} parent=47 // pred_check_branch
          %413 = sbr.rel (%p411) target = $region64
        $region63: #{tpu_custom_call.1} parent=47 // pred_region
          %414 = dma.done [#allocation9], 512
        $region64: #{tpu_custom_call.1} parent=47 // pred_fallthru
          _
        // Predicated region
        $region65: #{tpu_custom_call.1} parent=47 // pred_check
          %p415 = pneg %p145
        $region66: #{tpu_custom_call.1} parent=47 // pred_check_branch
          %417 = sbr.rel (%p415) target = $region68
        $region67: #{tpu_custom_call.1} parent=47 // pred_region
          %418 = dma.done [#allocation9], 128
        $region68: #{tpu_custom_call.1} parent=47 // pred_fallthru
          _
        // Predicated region
        $region69: #{tpu_custom_call.1} parent=47 // pred_check
          %p419 = pneg %p166
        $region70: #{tpu_custom_call.1} parent=47 // pred_check_branch
          %421 = sbr.rel (%p419) target = $region72
        $region71: #{tpu_custom_call.1} parent=47 // pred_region
          %422 = dma.done [#allocation12], 128
        $region72: #{tpu_custom_call.1} parent=47 // pred_fallthru
          _
        // Predicated region
        $region73: #{tpu_custom_call.1} parent=47 // pred_check
          %p423 = pneg %p187
        $region74: #{tpu_custom_call.1} parent=47 // pred_check_branch
          %425 = sbr.rel (%p423) target = $region76
        $region75: #{tpu_custom_call.1} parent=47 // pred_region
          %426 = dma.done [#allocation12], 16
        $region76: #{tpu_custom_call.1} parent=47 // pred_fallthru
          _
        %s427 = sand.u32 %s43, 1
        %s428 = scalar_lea.sflag [#allocation3], %s427
        %s429 = sand.u32 %s43, 1
        %s430 = smul.addr %s429, 64
        %s431 = scalar_lea.vmem [#allocation2], %s430
        %p432 = pneg %p56
        %p433 = pneg %p53
        %s434 = sand.u32 %s35, 1
        %s435 = scalar_lea.sflag [#allocation6], %s434
        %s436 = sand.u32 %s69, 1
        %s437 = smul.addr %s436, 8
        %s438 = scalar_lea.vmem [#allocation5], %s437
        %p439 = pneg %p82
        %p440 = pneg %p79
        %p441 = pneg %p103
        %p442 = pneg %p100
        %p443 = pneg %p124
        %p444 = pneg %p121
        %p445 = pneg %p145
        %p446 = pneg %p142
        %p447 = pneg %p166
        %p448 = pneg %p163
        %p449 = pneg %p187
        %p450 = pneg %p184
        %p451 = pneg %p213
        %p452 = pneg %p210
        %s453 = sand.u32 %s200, 1
        %s454 = scalar_lea.sflag [#allocation4], %s453
        %s455 = sand.u32 %s200, 1
        %s456 = smul.addr %s455, 64
        %s457 = scalar_lea.vmem [#allocation14], %s456
        %p458 = pneg %p239
        %p459 = pneg %p236
        %s460 = sand.u32 %s35, 1
        %s461 = scalar_lea.sflag [#allocation16], %s460
        %s462 = sand.u32 %s226, 1
        %s463 = smul.addr %s462, 16
        %s464 = scalar_lea.vmem [#allocation15], %s463
        %p465 = pneg %p265
        %p466 = pneg %p262
        %s467 = sand.u32 %s35, 1
        %s468 = scalar_lea.sflag [#allocation16], %s467
        %s469 = sand.u32 %s252, 1
        %s470 = smul.addr %s469, 8
        %s471 = scalar_lea.vmem [#allocation17], %s470
        %v472 = vld [vmem:[%s393] sm:$0xff]
        %v473 = vld [vmem:[%s393 + $0x8] sm:$0xff]
        %v474 = vld [vmem:[%s393 + $0x10] sm:$0xff]
        %v475 = vld [vmem:[%s393 + $0x18] sm:$0xff]
        %v476 = vld [vmem:[%s393 + $0x20] sm:$0xff]
        %v477 = vld [vmem:[%s393 + $0x28] sm:$0xff]
        %v478 = vld [vmem:[%s393 + $0x30] sm:$0xff]
        %v479 = vld [vmem:[%s393 + $0x38] sm:$0xff]
        %v480 = vadd.f32 %v472, %v474
        %v481 = vadd.f32 %v480, %v476
        %v482 = vadd.f32 %v481, %v478
        %v483 = vrot.slane %v482, 4
        %v484 = vadd.f32 %v482, %v483
        %v485 = vrot.slane %v484, 2
        %v486 = vadd.f32 %v484, %v485
        %v487 = vrot.slane %v486, 1
        %v488 = vadd.f32 %v486, %v487
        %v489 = vadd.f32 %v473, %v475
        %v490 = vadd.f32 %v489, %v477
        %v491 = vadd.f32 %v490, %v479
        %v492 = vrot.slane %v491, 4
        %v493 = vadd.f32 %v491, %v492
        %v494 = vrot.slane %v493, 2
        %v495 = vadd.f32 %v493, %v494
        %v496 = vrot.slane %v495, 1
        %v497 = vadd.f32 %v495, %v496
        %v498 = vrcp.pop 32.0
        %v499 = vmul.f32 %v488, %v498
        %v500 = vmul.f32 %v497, %v498
        %v501 = vsub.f32 %v472, %v499
        %v502 = vsub.f32 %v473, %v500
        %v503 = vsub.f32 %v474, %v499
        %v504 = vsub.f32 %v475, %v500
        %v505 = vsub.f32 %v476, %v499
        %v506 = vsub.f32 %v477, %v500
        %v507 = vsub.f32 %v478, %v499
        %v508 = vsub.f32 %v479, %v500
        %v509 = vmul.f32 %v501, %v501
        %v510 = vmul.f32 %v502, %v502
        %v511 = vmul.f32 %v503, %v503
        %v512 = vmul.f32 %v504, %v504
        %v513 = vmul.f32 %v505, %v505
        %v514 = vmul.f32 %v506, %v506
        %v515 = vmul.f32 %v507, %v507
        %v516 = vmul.f32 %v508, %v508
        %v517 = vadd.f32 %v509, %v511
        %v518 = vadd.f32 %v517, %v513
        %v519 = vadd.f32 %v518, %v515
        %v520 = vrot.slane %v519, 4
        %v521 = vadd.f32 %v519, %v520
        %v522 = vrot.slane %v521, 2
        %v523 = vadd.f32 %v521, %v522
        %v524 = vrot.slane %v523, 1
        %v525 = vadd.f32 %v523, %v524
        %v526 = vadd.f32 %v510, %v512
        %v527 = vadd.f32 %v526, %v514
        %v528 = vadd.f32 %v527, %v516
        %v529 = vrot.slane %v528, 4
        %v530 = vadd.f32 %v528, %v529
        %v531 = vrot.slane %v530, 2
        %v532 = vadd.f32 %v530, %v531
        %v533 = vrot.slane %v532, 1
        %v534 = vadd.f32 %v532, %v533
        %v535 = vmul.f32 %v525, %v498
        %v536 = vmul.f32 %v534, %v498
        %v537 = vadd.f32 %v535, 1e-05
        %v538 = vadd.f32 %v536, 1e-05
        %v539 = vrsqrt.pop %v537
        %v540 = vrsqrt.pop %v538
        %v541 = vmul.f32 %v501, %v539
        %v542 = vmul.f32 %v502, %v540
        %v543 = vmul.f32 %v503, %v539
        %v544 = vmul.f32 %v504, %v540
        %v545 = vmul.f32 %v505, %v539
        %v546 = vmul.f32 %v506, %v540
        %v547 = vmul.f32 %v507, %v539
        %v548 = vmul.f32 %v508, %v540
        %v549 = vld [vmem:[#allocation7] sm:$0xff]
        %v550 = vld [vmem:[#allocation7 + $0x8] sm:$0xff]
        %v551 = vld [vmem:[#allocation7 + $0x10] sm:$0xff]
        %v552 = vld [vmem:[#allocation7 + $0x18] sm:$0xff]
        %v553 = vld [vmem:[#allocation8] sm:$0xff]
        %v554 = vld [vmem:[#allocation8 + $0x8] sm:$0xff]
        %v555 = vld [vmem:[#allocation8 + $0x10] sm:$0xff]
        %v556 = vld [vmem:[#allocation8 + $0x18] sm:$0xff]
        %558 = vset.pattern.permute.xlu0 0
        %559 = vperm.xlu0 %558, %v553
        %v560 = vpop.permute.xlu0 %559
        %563 = vset.pattern.permute.xlu0 0
        %564 = vperm.xlu0 %563, %v554
        %v565 = vpop.permute.xlu0 %564
        %568 = vset.pattern.permute.xlu0 0
        %569 = vperm.xlu0 %568, %v555
        %v570 = vpop.permute.xlu0 %569
        %573 = vset.pattern.permute.xlu0 0
        %574 = vperm.xlu0 %573, %v556
        %v575 = vpop.permute.xlu0 %574
        %vm577 = vcmask 261120
        %v579 = vsel %vm577, %v549, 0
        %v582 = vsel %vm577, %v550, 0
        %v585 = vsel %vm577, %v551, 0
        %v588 = vsel %vm577, %v552, 0
        %590 = vmatprep.subr.mxu0 %v542
        %591 = vmatpush1.msra.mxu0 %v541
        %592 = vmatprep.subr.mxu0 %v544
        %593 = vmatpush1.msra.mxu0 %v543
        %594 = vmatprep.subr.mxu0 %v546
        %595 = vmatpush1.msra.mxu0 %v545
        %596 = vmatprep.subr.mxu0 %v548
        %597 = vmatpush1.msra.mxu0 %v547
        %598 = vmatprep.subr.mxu0 0.0
        %599 = vmatpush1.msra.mxu0 0.0
        %600 = vmatprep.subr.mxu0 0.0
        %601 = vmatpush1.msra.mxu0 0.0
        %602 = vmatprep.subr.mxu0 0.0
        %603 = vmatpush1.msra.mxu0 0.0
        %604 = vmatprep.subr.mxu0 0.0
        %605 = vmatpush1.msra.mxu0 0.0
        %606 = vmatprep.subr.mxu0 0.0
        %607 = vmatpush1.msra.mxu0 0.0
        %608 = vmatprep.subr.mxu0 0.0
        %609 = vmatpush1.msra.mxu0 0.0
        %610 = vmatprep.subr.mxu0 0.0
        %611 = vmatpush1.msra.mxu0 0.0
        %612 = vmatprep.subr.mxu0 0.0
        %613 = vmatpush1.msra.mxu0 0.0
        %614 = vmatprep.subr.mxu0 0.0
        %615 = vmatpush1.msra.mxu0 0.0
        %616 = vmatprep.subr.mxu0 0.0
        %617 = vmatpush1.msra.mxu0 0.0
        %618 = vmatprep.subr.mxu0 0.0
        %619 = vmatpush1.msra.mxu0 0.0
        %620 = vmatprep.subr.mxu0 0.0
        %621 = vmatpush1.msra.mxu0 0.0
        %622 = vmatprep.subr.mxu0 0.0
        %623 = vmatpush1.msra.mxu0 0.0
        %624 = vmatprep.subr.mxu0 0.0
        %625 = vmatpush1.msra.mxu0 0.0
        %626 = vmatprep.subr.mxu0 0.0
        %627 = vmatpush1.msra.mxu0 0.0
        %628 = vmatprep.subr.mxu0 0.0
        %629 = vmatpush1.msra.mxu0 0.0
        %630 = vmatprep.subr.mxu0 0.0
        %631 = vmatpush1.msra.mxu0 0.0
        %632 = vmatprep.subr.mxu0 0.0
        %633 = vmatpush1.msra.mxu0 0.0
        %634 = vmatprep.subr.mxu0 0.0
        %635 = vmatpush1.msra.mxu0 0.0
        %636 = vmatprep.subr.mxu0 0.0
        %637 = vmatpush1.msra.mxu0 0.0
        %638 = vmatprep.subr.mxu0 0.0
        %639 = vmatpush1.msra.mxu0 0.0
        %640 = vmatprep.subr.mxu0 0.0
        %641 = vmatpush1.msra.mxu0 0.0
        %642 = vmatprep.subr.mxu0 0.0
        %643 = vmatpush1.msra.mxu0 0.0
        %644 = vmatprep.subr.mxu0 0.0
        %645 = vmatpush1.msra.mxu0 0.0
        %646 = vmatprep.subr.mxu0 0.0
        %647 = vmatpush1.msra.mxu0 0.0
        %648 = vmatprep.subr.mxu0 0.0
        %649 = vmatpush1.msra.mxu0 0.0
        %650 = vmatprep.subr.mxu0 0.0
        %651 = vmatpush1.msra.mxu0 0.0
        %652 = vmatprep.subr.mxu0 0.0
        %653 = vmatpush1.msra.mxu0 0.0
        %654 = vmatprep.mubr.f32.mxu0 0.0
        %655 = vmatmul.mubr.f32.gmra.mrb[0].mxu0 %v579
        %v656 = vpop.f32.mrb[0].mxu0
        %v657 = vadd.f32 %v560, %v656
        %v658 = vpop.f32.mrb[0].mxu0
        %v659 = vadd.f32 %v560, %v658
        %660 = vmatprep.mubr.f32.mxu0 0.0
        %661 = vmatmul.mubr.f32.gmra.mrb[0].mxu0 %v582
        %v662 = vpop.f32.mrb[0].mxu0
        %v663 = vadd.f32 %v565, %v662
        %v664 = vpop.f32.mrb[0].mxu0
        %v665 = vadd.f32 %v565, %v664
        %666 = vmatprep.mubr.f32.mxu0 0.0
        %667 = vmatmul.mubr.f32.gmra.mrb[0].mxu0 %v585
        %v668 = vpop.f32.mrb[0].mxu0
        %v669 = vadd.f32 %v570, %v668
        %v670 = vpop.f32.mrb[0].mxu0
        %v671 = vadd.f32 %v570, %v670
        %672 = vmatprep.mubr.f32.mxu0 0.0
        %673 = vmatmul.mubr.f32.gmra.mrb[0].mxu0 %v588
        %v674 = vpop.f32.mrb[0].mxu0
        %v675 = vadd.f32 %v575, %v674
        %v676 = vpop.f32.mrb[0].mxu0
        %v677 = vadd.f32 %v575, %v676
        %678 = vdwg.mxu0
        %679 = vst [vmem:[%s457] sm:$0xff] %v657
        %680 = vst [vmem:[%s457 + $0x8] sm:$0xff] %v659
        %681 = vst [vmem:[%s457 + $0x10] sm:$0xff] %v663
        %682 = vst [vmem:[%s457 + $0x18] sm:$0xff] %v665
        %683 = vst [vmem:[%s457 + $0x20] sm:$0xff] %v669
        %684 = vst [vmem:[%s457 + $0x28] sm:$0xff] %v671
        %685 = vst [vmem:[%s457 + $0x30] sm:$0xff] %v675
        %686 = vst [vmem:[%s457 + $0x38] sm:$0xff] %v677
        %v687 = vld [vmem:[#allocation10] sm:$0xff]
        %v688 = vld [vmem:[#allocation11] sm:$0xff]
        %690 = vset.pattern.permute.xlu0 0
        %691 = vperm.xlu0 %690, %v688
        %v692 = vpop.permute.xlu0 %691
        %v695 = vsel %vm577, %v687, 0
        %697 = vmatprep.subr.mxu0 %v542
        %698 = vmatpush1.msra.mxu0 %v541
        %699 = vmatprep.subr.mxu0 %v544
        %700 = vmatpush1.msra.mxu0 %v543
        %701 = vmatprep.subr.mxu0 %v546
        %702 = vmatpush1.msra.mxu0 %v545
        %703 = vmatprep.subr.mxu0 %v548
        %704 = vmatpush1.msra.mxu0 %v547
        %705 = vmatprep.subr.mxu0 0.0
        %706 = vmatpush1.msra.mxu0 0.0
        %707 = vmatprep.subr.mxu0 0.0
        %708 = vmatpush1.msra.mxu0 0.0
        %709 = vmatprep.subr.mxu0 0.0
        %710 = vmatpush1.msra.mxu0 0.0
        %711 = vmatprep.subr.mxu0 0.0
        %712 = vmatpush1.msra.mxu0 0.0
        %713 = vmatprep.subr.mxu0 0.0
        %714 = vmatpush1.msra.mxu0 0.0
        %715 = vmatprep.subr.mxu0 0.0
        %716 = vmatpush1.msra.mxu0 0.0
        %717 = vmatprep.subr.mxu0 0.0
        %718 = vmatpush1.msra.mxu0 0.0
        %719 = vmatprep.subr.mxu0 0.0
        %720 = vmatpush1.msra.mxu0 0.0
        %721 = vmatprep.subr.mxu0 0.0
        %722 = vmatpush1.msra.mxu0 0.0
        %723 = vmatprep.subr.mxu0 0.0
        %724 = vmatpush1.msra.mxu0 0.0
        %725 = vmatprep.subr.mxu0 0.0
        %726 = vmatpush1.msra.mxu0 0.0
        %727 = vmatprep.subr.mxu0 0.0
        %728 = vmatpush1.msra.mxu0 0.0
        %729 = vmatprep.subr.mxu0 0.0
        %730 = vmatpush1.msra.mxu0 0.0
        %731 = vmatprep.subr.mxu0 0.0
        %732 = vmatpush1.msra.mxu0 0.0
        %733 = vmatprep.subr.mxu0 0.0
        %734 = vmatpush1.msra.mxu0 0.0
        %735 = vmatprep.subr.mxu0 0.0
        %736 = vmatpush1.msra.mxu0 0.0
        %737 = vmatprep.subr.mxu0 0.0
        %738 = vmatpush1.msra.mxu0 0.0
        %739 = vmatprep.subr.mxu0 0.0
        %740 = vmatpush1.msra.mxu0 0.0
        %741 = vmatprep.subr.mxu0 0.0
        %742 = vmatpush1.msra.mxu0 0.0
        %743 = vmatprep.subr.mxu0 0.0
        %744 = vmatpush1.msra.mxu0 0.0
        %745 = vmatprep.subr.mxu0 0.0
        %746 = vmatpush1.msra.mxu0 0.0
        %747 = vmatprep.subr.mxu0 0.0
        %748 = vmatpush1.msra.mxu0 0.0
        %749 = vmatprep.subr.mxu0 0.0
        %750 = vmatpush1.msra.mxu0 0.0
        %751 = vmatprep.subr.mxu0 0.0
        %752 = vmatpush1.msra.mxu0 0.0
        %753 = vmatprep.subr.mxu0 0.0
        %754 = vmatpush1.msra.mxu0 0.0
        %755 = vmatprep.subr.mxu0 0.0
        %756 = vmatpush1.msra.mxu0 0.0
        %757 = vmatprep.subr.mxu0 0.0
        %758 = vmatpush1.msra.mxu0 0.0
        %759 = vmatprep.subr.mxu0 0.0
        %760 = vmatpush1.msra.mxu0 0.0
        %761 = vmatprep.mubr.f32.mxu0 0.0
        %762 = vmatmul.mubr.f32.gmra.mrb[0].mxu0 %v695
        %v763 = vpop.f32.mrb[0].mxu0
        %v764 = vadd.f32 %v692, %v763
        %v765 = vpop.f32.mrb[0].mxu0
        %v766 = vadd.f32 %v692, %v765
        %767 = vdwg.mxu0
        %768 = vst [vmem:[%s464] sm:$0xff] %v764
        %769 = vst [vmem:[%s464 + $0x8] sm:$0xff] %v766
        %v770 = vld [vmem:[%s402] sm:$0xff]
        %v771 = vsel %vm577, %v770, 0.0
        %772 = vadd.xlane.f32.xlu0 %v771
        %v773 = vpop.xlane.xlu0 %772
        %v774 = vmul.f32 %v773, %v498
        %v775 = vsub.f32 %v770, %v774
        %v776 = vmul.f32 %v775, %v775
        %v777 = vsel %vm577, %v776, 0.0
        %778 = vadd.xlane.f32.xlu0 %v777
        %v779 = vpop.xlane.xlu0 %778
        %v780 = vmul.f32 %v779, %v498
        %v781 = vadd.f32 %v780, 1e-05
        %v782 = vrsqrt.pop %v781
        %v783 = vmul.f32 %v775, %v782
        %v784 = vld [vmem:[#allocation10] sm:$0xff]
        %v785 = vld [vmem:[#allocation13] sm:$0x1]
        %v787 = vlaneseq
        %v788 = vshrl.u32 %v787, 7
        %v789 = vsub.s32 0, %v788
        %v790 = vrot.slane %v785, %v789
        %v793 = vsel %vm577, %v783, 0
        %v796 = vsel %vm577, %v784, 0
        %798 = vmatprep.subr.mxu0 0.0
        %799 = vmatpush1.xpose.msra.mxu0 %v796
        %800 = vmatprep.subr.mxu0 0.0
        %801 = vmatpush1.xpose.msra.mxu0 0.0
        %802 = vmatprep.subr.mxu0 0.0
        %803 = vmatpush1.xpose.msra.mxu0 0.0
        %804 = vmatprep.subr.mxu0 0.0
        %805 = vmatpush1.xpose.msra.mxu0 0.0
        %806 = vmatprep.subr.mxu0 0.0
        %807 = vmatpush1.xpose.msra.mxu0 0.0
        %808 = vmatprep.subr.mxu0 0.0
        %809 = vmatpush1.xpose.msra.mxu0 0.0
        %810 = vmatprep.subr.mxu0 0.0
        %811 = vmatpush1.xpose.msra.mxu0 0.0
        %812 = vmatprep.subr.mxu0 0.0
        %813 = vmatpush1.xpose.msra.mxu0 0.0
        %814 = vmatprep.subr.mxu0 0.0
        %815 = vmatpush1.xpose.msra.mxu0 0.0
        %816 = vmatprep.subr.mxu0 0.0
        %817 = vmatpush1.xpose.msra.mxu0 0.0
        %818 = vmatprep.subr.mxu0 0.0
        %819 = vmatpush1.xpose.msra.mxu0 0.0
        %820 = vmatprep.subr.mxu0 0.0
        %821 = vmatpush1.xpose.msra.mxu0 0.0
        %822 = vmatprep.subr.mxu0 0.0
        %823 = vmatpush1.xpose.msra.mxu0 0.0
        %824 = vmatprep.subr.mxu0 0.0
        %825 = vmatpush1.xpose.msra.mxu0 0.0
        %826 = vmatprep.subr.mxu0 0.0
        %827 = vmatpush1.xpose.msra.mxu0 0.0
        %828 = vmatprep.subr.mxu0 0.0
        %829 = vmatpush1.xpose.msra.mxu0 0.0
        %830 = vmatprep.subr.mxu0 0.0
        %831 = vmatpush1.xpose.msra.mxu0 0.0
        %832 = vmatprep.subr.mxu0 0.0
        %833 = vmatpush1.xpose.msra.mxu0 0.0
        %834 = vmatprep.subr.mxu0 0.0
        %835 = vmatpush1.xpose.msra.mxu0 0.0
        %836 = vmatprep.subr.mxu0 0.0
        %837 = vmatpush1.xpose.msra.mxu0 0.0
        %838 = vmatprep.subr.mxu0 0.0
        %839 = vmatpush1.xpose.msra.mxu0 0.0
        %840 = vmatprep.subr.mxu0 0.0
        %841 = vmatpush1.xpose.msra.mxu0 0.0
        %842 = vmatprep.subr.mxu0 0.0
        %843 = vmatpush1.xpose.msra.mxu0 0.0
        %844 = vmatprep.subr.mxu0 0.0
        %845 = vmatpush1.xpose.msra.mxu0 0.0
        %846 = vmatprep.subr.mxu0 0.0
        %847 = vmatpush1.xpose.msra.mxu0 0.0
        %848 = vmatprep.subr.mxu0 0.0
        %849 = vmatpush1.xpose.msra.mxu0 0.0
        %850 = vmatprep.subr.mxu0 0.0
        %851 = vmatpush1.xpose.msra.mxu0 0.0
        %852 = vmatprep.subr.mxu0 0.0
        %853 = vmatpush1.xpose.msra.mxu0 0.0
        %854 = vmatprep.subr.mxu0 0.0
        %855 = vmatpush1.xpose.msra.mxu0 0.0
        %856 = vmatprep.subr.mxu0 0.0
        %857 = vmatpush1.xpose.msra.mxu0 0.0
        %858 = vmatprep.subr.mxu0 0.0
        %859 = vmatpush1.xpose.msra.mxu0 0.0
        %860 = vmatprep.subr.mxu0 0.0
        %861 = vmatpush1.xpose.msra.mxu0 0.0
        %862 = vmatprep.mubr.f32.mxu0 0.0
        %863 = vmatmul.mubr.f32.gmra.mrb[0].mxu0 %v793
        %v864 = vpop.f32.mrb[0].mxu0
        %v865 = vadd.f32 %v790, %v864
        %v866 = vpop.f32.mrb[0].mxu0
        %867 = vdwg.mxu0
        %vm868 = vcmask 64512
        %869 = vst.msk [vmem:[%s471] sm:$0xff] %vm868, %v865
        %s870 = sand.u32 %s200, 1
        %s871 = scalar_lea.sflag [#allocation4], %s870
        %s872 = sand.u32 %s200, 1
        %s873 = smul.addr %s872, 64
        %s874 = scalar_lea.vmem [#allocation14], %s873
        %s875 = sand.u32 %s35, 1
        %s876 = scalar_lea.sflag [#allocation16], %s875
        %s877 = sand.u32 %s226, 1
        %s878 = smul.addr %s877, 16
        %s879 = scalar_lea.vmem [#allocation15], %s878
        %s880 = sand.u32 %s35, 1
        %s881 = scalar_lea.sflag [#allocation16], %s880
        %s882 = sand.u32 %s252, 1
        %s883 = smul.addr %s882, 8
        %s884 = scalar_lea.vmem [#allocation17], %s883
        // Predicated region
        $region77: #{tpu_custom_call.1} parent=47 // pred_check
          %p885 = pneg %p210
        $region78: #{tpu_custom_call.1} parent=47 // pred_check_branch
          %887 = sbr.rel (%p885) target = $region80
        $region79: #{tpu_custom_call.1} parent=47 // pred_region
          %s889 = ssub.s32 1024, 1024
          %890 = vsyncadd %s871, %s889
          %s891 = smul.addr %s35, 8
          %s892 = smul.addr %s891, 128
          %s893 = scalar_lea.hbm %s7, %s892
          %s894 = sshll.u32 %s874, 4
          %s895 = int_to_ptr.vmem [resolvable:$true] %s894
          %900 = dma.vmem_to_hbm [thread:$0]  %s895, 1024, %s893, %s871, 256, 256, 16
        $region80: #{tpu_custom_call.1} parent=47 // pred_fallthru
          _
        // Predicated region
        $region81: #{tpu_custom_call.1} parent=47 // pred_check
          %p901 = pneg %p236
        $region82: #{tpu_custom_call.1} parent=47 // pred_check_branch
          %903 = sbr.rel (%p901) target = $region84
        $region83: #{tpu_custom_call.1} parent=47 // pred_region
          %s905 = ssub.s32 256, 256
          %906 = vsyncadd %s876, %s905
          %s907 = smul.addr %s35, 2
          %s908 = smul.addr %s907, 128
          %s909 = scalar_lea.hbm %s8, %s908
          %s911 = sshll.u32 %s879, 4
          %s912 = int_to_ptr.vmem [resolvable:$true] %s911
          %914 = dma.vmem_to_hbm [thread:$0]  %s912, 256, %s909, %s876
        $region84: #{tpu_custom_call.1} parent=47 // pred_fallthru
          _
        // Predicated region
        $region85: #{tpu_custom_call.1} parent=47 // pred_check
          %p915 = pneg %p262
        $region86: #{tpu_custom_call.1} parent=47 // pred_check_branch
          %917 = sbr.rel (%p915) target = $region88
        $region87: #{tpu_custom_call.1} parent=47 // pred_region
          %s919 = ssub.s32 128, 128
          %920 = vsyncadd %s881, %s919
          %s921 = smul.addr %s35, 128
          %s922 = scalar_lea.hbm %s9, %s921
          %s924 = sshll.u32 %s884, 4
          %s925 = int_to_ptr.vmem [resolvable:$true] %s924
          %927 = dma.vmem_to_hbm [thread:$0]  %s925, 128, %s922, %s881
        $region88: #{tpu_custom_call.1} parent=47 // pred_fallthru
          _
      $region48: #{tpu_custom_call.1} parent=5 // pred_fallthru
        _
      %p928 = scmp.le.s32.totalorder 2, %s30
      // Predicated region
      $region89: #{tpu_custom_call.1} parent=5 // pred_check
        %p929 = pneg %p928
      $region90: #{tpu_custom_call.1} parent=5 // pred_check_branch
        %931 = sbr.rel (%p929) target = $region92
      $region91: #{tpu_custom_call.1} parent=5 // pred_region
        %s932 = ssub.s32 %s30, 2
        // Predicated region
        $region93: #{tpu_custom_call.1} parent=91 // pred_check
          %p933 = pneg %p216
        $region94: #{tpu_custom_call.1} parent=91 // pred_check_branch
          %935 = sbr.rel (%p933) target = $region96
        $region95: #{tpu_custom_call.1} parent=91 // pred_region
          %s936 = sand.u32 %s201, 1
          %s937 = scalar_lea.sflag [#allocation4], %s936
          %s938 = sand.u32 %s201, 1
          %s939 = smul.addr %s938, 64
          %s940 = scalar_lea.vmem [#allocation14], %s939
          %941 = dma.done %s937, 1024
        $region96: #{tpu_custom_call.1} parent=91 // pred_fallthru
          _
        // Predicated region
        $region97: #{tpu_custom_call.1} parent=91 // pred_check
          %p942 = pneg %p242
        $region98: #{tpu_custom_call.1} parent=91 // pred_check_branch
          %944 = sbr.rel (%p942) target = $region100
        $region99: #{tpu_custom_call.1} parent=91 // pred_region
          %s945 = sand.u32 %s36, 1
          %s946 = scalar_lea.sflag [#allocation16], %s945
          %s947 = sand.u32 %s227, 1
          %s948 = smul.addr %s947, 16
          %s949 = scalar_lea.vmem [#allocation15], %s948
          %950 = dma.done %s946, 256
        $region100: #{tpu_custom_call.1} parent=91 // pred_fallthru
          _
        // Predicated region
        $region101: #{tpu_custom_call.1} parent=91 // pred_check
          %p951 = pneg %p268
        $region102: #{tpu_custom_call.1} parent=91 // pred_check_branch
          %953 = sbr.rel (%p951) target = $region104
        $region103: #{tpu_custom_call.1} parent=91 // pred_region
          %s954 = sand.u32 %s36, 1
          %s955 = scalar_lea.sflag [#allocation16], %s954
          %s956 = sand.u32 %s253, 1
          %s957 = smul.addr %s956, 8
          %s958 = scalar_lea.vmem [#allocation17], %s957
          %959 = dma.done %s955, 128
        $region104: #{tpu_custom_call.1} parent=91 // pred_fallthru
          _
      $region92: #{tpu_custom_call.1} parent=5 // pred_fallthru
        _
    $region6: #{tpu_custom_call.1} parent=1 // loop_footer
      %s34 = sadd.s32 1, %s30
    $region7: #{tpu_custom_call.1} parent=1 // loop_footer_branch
      %29 = sbr.rel target = $region3
    $region8: #{tpu_custom_call.1} parent=1 // loop_exit
      _
    %960 = vsyncpa [#allocation3], 1
    %s961 = scalar_lea.sflag [#allocation3], 1
    %962 = vsyncpa %s961, 1
    %963 = vsyncpa [#allocation6], 1
    %s964 = scalar_lea.sflag [#allocation6], 1
    %965 = vsyncpa %s964, 1
    %966 = vsyncpa [#allocation9], 1
    %967 = vsyncpa [#allocation12], 1
    %968 = vsyncpa [#allocation4], 1
    %s969 = scalar_lea.sflag [#allocation4], 1
    %970 = vsyncpa %s969, 1
    %971 = vsyncpa [#allocation16], 1
    %s972 = scalar_lea.sflag [#allocation16], 1
    %973 = vsyncpa %s972, 1

</llo_original>
